<compile_context>
chip_gen: v7x
topology: tpu7x:2x2x1
jax: 0.10.0
libtpu: 0.0.40
codegen_flags: <defaults>
</compile_context>

<pallas_src>
import numpy as np
import jax
import jax.numpy as jnp
from jax import lax
from jax.experimental import pallas as pl
from jax.experimental.pallas import tpu as pltpu

# ----------------------------------------------------------------------------
# "configer" values (deterministic, in-script)
# ----------------------------------------------------------------------------
TEMPERATURE = 0.1        # configer.get('contrast', 'temperature')
BASE_TEMPERATURE = 0.07  # configer.get('contrast', 'base_temperature')
IGNORE_LABEL = -1        # loss.params.ce_ignore_index
MAX_SAMPLES = 64         # configer.get('contrast', 'max_samples')
MAX_VIEWS = 16           # configer.get('contrast', 'max_views')

INV_TEMPERATURE = 1.0 / TEMPERATURE

# Static anchor*view capacity.  total_classes * n_view <= MAX_SAMPLES = 64, so 128 is always
# enough and keeps the (N, N) intermediates lane-dense.
N_PAD = 128


# ----------------------------------------------------------------------------
# Pallas kernel: the _contrastive() hot path (static shapes, padded + masked)
# ----------------------------------------------------------------------------
def _contrastive_kernel(n_ref, feat_ref, lab_col_ref, lab_row_ref, inv_cnt_ref, out_ref):
    # n_ref       : SMEM (1,) int32    -- true number of anchor*view rows (<= N_PAD)
    # feat_ref    : VMEM (NP, C)  f32  -- gathered contrast features (rows >= N are don't-care)
    # lab_col_ref : VMEM (NP, 1) int32 -- remapped class ids (column form), padding = -1
    # lab_row_ref : VMEM (1, NP) int32 -- same labels, lane-dense row form
    # inv_cnt_ref : VMEM (NP, 1) f32   -- exact 1/|positives| per row, 0 for padded/degenerate
    # out_ref     : VMEM (1, 1)  f32   -- scalar loss
    npad = feat_ref.shape[0]
    n_true = n_ref[0]

    row_iota = lax.broadcasted_iota(jnp.int32, (npad, 1), 0)
    col_iota = lax.broadcasted_iota(jnp.int32, (1, npad), 1)
    row_valid = row_iota < n_true            # (NP, 1) bool
    col_valid = col_iota < n_true            # (1, NP) bool

    # Zero padded feature rows so padded rows/cols of `dots` are exactly 0 (keeps every
    # downstream value finite).  Cheap: (NP, C) select.
    f = jnp.where(row_valid, feat_ref[...], 0.0)

    # anchor . contrast / temperature on the MXU (1/T folded into a constant multiply).
    dots = lax.dot_general(
        f, f, dimension_numbers=(((1,), (1,)), ((), ())),
        preferred_element_type=jnp.float32) * INV_TEMPERATURE

    # Label-equality mask: pure VPU broadcast compare (no MXU matmul, no cross-lane
    # transpose).  Padded labels are -1 and never match a valid remapped class id >= 0.
    mask_eq = lab_col_ref[...] == lab_row_ref[...]           # (NP, NP) bool

    # Row max over valid columns only (finite sentinel avoids inf/NaN arithmetic).
    logits_max = jnp.max(jnp.where(col_valid, dots, jnp.float32(-3.0e38)),
                         axis=1, keepdims=True)
    logits = dots - logits_max
    exp_logits = jnp.exp(logits)

    # Negatives: different label, valid column.  (Diagonal is a "same label" entry, so it is
    # excluded from the negatives exactly like the torch code.)
    neg_sum = jnp.sum(jnp.where(col_valid & (~mask_eq), exp_logits, 0.0),
                      axis=1, keepdims=True)

    # NOTE: intentionally reproduces the torch quirk log(exp(logit_ij) + sum_neg_i),
    #       not a standard full log-sum-exp.
    log_prob = logits - jnp.log(exp_logits + neg_sum)

    # Positives: same label, off-diagonal.
    pos_mask = mask_eq & (row_iota != col_iota)
    pos_sum = jnp.sum(jnp.where(pos_mask, log_prob, 0.0), axis=1, keepdims=True)

    # Per-row 1/|positives| is exact and precomputed on the host; padded / degenerate rows
    # carry 0.  The row_valid select keeps padded rows at exactly 0 regardless of their
    # (finite) garbage pos_sum.
    mean_log_prob_pos = jnp.where(row_valid, pos_sum * inv_cnt_ref[...], 0.0)

    loss = (-(TEMPERATURE / BASE_TEMPERATURE)
            * jnp.sum(mean_log_prob_pos) / n_true.astype(jnp.float32))
    out_ref[...] = jnp.full((1, 1), loss, dtype=jnp.float32)


# ----------------------------------------------------------------------------
# Device-side wrapper: sparse on-device gather + pallas_call (single static shape)
# ----------------------------------------------------------------------------
@jax.jit
def _contrast_loss_device(feats_nchw, n_arr, b_idx, p_idx, lab_idx, inv_cnt):
    """feats_nchw: (B, C, H, W); n_arr: (1,) i32; b_idx/p_idx/lab_idx: (N_PAD,) i32;
    inv_cnt: (N_PAD,) f32 exact per-row 1/|positives| (0 for padded rows)."""
    b, c, h, w = feats_nchw.shape

    # Gather only the <= N_PAD sampled pixel vectors straight from NCHW (strided gather);
    # no full-map transpose / reshape round trip through HBM.
    feats_flat = feats_nchw.reshape(b, c, h * w)
    gathered = feats_flat[b_idx, :, p_idx].astype(jnp.float32)        # (N_PAD, C)

    lab_col = lab_idx.reshape(N_PAD, 1).astype(jnp.int32)
    lab_row = lab_idx.reshape(1, N_PAD).astype(jnp.int32)
    inv_cnt2d = inv_cnt.reshape(N_PAD, 1).astype(jnp.float32)

    out = pl.pallas_call(
        _contrastive_kernel,
        out_shape=jax.ShapeDtypeStruct((1, 1), jnp.float32),
        grid_spec=pltpu.PrefetchScalarGridSpec(
            num_scalar_prefetch=1,                 # true N lands in SMEM
            grid=(1,),
            in_specs=[
                # Full-array last dim (C) is a legal BlockSpec — no pad to 128 needed.
                pl.BlockSpec((N_PAD, c), lambda i, n: (0, 0)),
                pl.BlockSpec((N_PAD, 1), lambda i, n: (0, 0)),
                pl.BlockSpec((1, N_PAD), lambda i, n: (0, 0)),
                pl.BlockSpec((N_PAD, 1), lambda i, n: (0, 0)),
            ],
            out_specs=pl.BlockSpec((1, 1), lambda i, n: (0, 0)),
        ),
        compiler_params=pltpu.CompilerParams(
            dimension_semantics=("arbitrary",)),
    )(n_arr, gathered, lab_col, lab_row, inv_cnt2d)
    return out[0, 0]


# ----------------------------------------------------------------------------
# Host-side glue (dynamic-shape sampling -> indices only; mirrors the torch code)
# ----------------------------------------------------------------------------
def _nearest_interp_pt(labels, out_h, out_w):
    # PyTorch F.interpolate(mode='nearest'): src_idx = floor(dst_idx * in / out)
    _, in_h, in_w = labels.shape
    ri = (np.arange(out_h) * in_h // out_h).astype(np.int64)
    ci = (np.arange(out_w) * in_w // out_w).astype(np.int64)
    return labels[:, ri][:, :, ci]


def _random_anchor_sampling_indices(y_hat, rng):
    """Host port of PixelContrastLossSeq._random_anchor_sampling that only computes
    *indices*.  Returns view-major, N_PAD-padded (batch_idx, pixel_idx, remapped_label,
    inv_pos_count) arrays plus the true row count N = total_classes * n_view."""
    batch_size = y_hat.shape[0]
    classes, total_classes = [], 0
    for ii in range(batch_size):
        this_y = y_hat[ii]
        this_classes = [int(c) for c in np.unique(this_y) if c != IGNORE_LABEL]
        this_classes = [c for c in this_classes
                        if int((this_y == c).sum()) > MAX_VIEWS]
        classes.append(this_classes)
        total_classes += len(this_classes)
    if total_classes == 0:
        return None
    n_view = min(MAX_SAMPLES // total_classes, MAX_VIEWS)
    if n_view == 0:
        # TODO(synk): total_classes > max_samples is degenerate in the torch code too.
        return None

    batch_ids = np.zeros((total_classes, n_view), dtype=np.int32)
    pixel_ids = np.zeros((total_classes, n_view), dtype=np.int32)
    y_ = np.zeros((total_classes,), dtype=np.int64)
    ptr = 0
    for ii in range(batch_size):
        for cls_id in classes[ii]:
            indices = np.nonzero(y_hat[ii] == cls_id)[0]
            # TODO(synk): torch.randperm RNG stream replaced by numpy RNG
            perm = rng.permutation(indices.shape[0])
            keep = indices[perm[:n_view]]
            batch_ids[ptr] = ii
            pixel_ids[ptr] = keep
            y_[ptr] = cls_id
            ptr += 1

    n_true = total_classes * n_view
    assert n_true <= N_PAD
    # contrast_feature = cat(unbind(feats_, dim=1)) -> row i = v * total_classes + a
    b_flat = batch_ids.T.reshape(-1)
    p_flat = pixel_ids.T.reshape(-1)
    lab_raw = np.tile(y_, n_view)
    _, lab_inv = np.unique(lab_raw, return_inverse=True)    # remap class ids -> [0, n_uniq)

    # Exact per-row positive counts (same class label, excluding self).  NOT always
    # n_view-1: if two images share a class the count is 2*n_view-1, matching mask.sum(1)
    # in the torch reference.
    cls_counts = np.bincount(lab_inv)
    pos_cnt = cls_counts[lab_inv] - 1
    # TODO(synk): rows with zero positives would be NaN in the torch reference
    # (mask.sum(1) == 0); here they contribute 0 instead.
    inv_cnt = np.where(pos_cnt > 0, 1.0 / np.maximum(pos_cnt, 1), 0.0).astype(np.float32)

    b_pad = np.zeros((N_PAD,), dtype=np.int32)
    p_pad = np.zeros((N_PAD,), dtype=np.int32)
    lab_pad = np.full((N_PAD,), -1, dtype=np.int32)
    inv_pad = np.zeros((N_PAD,), dtype=np.float32)
    b_pad[:n_true] = b_flat
    p_pad[:n_true] = p_flat
    lab_pad[:n_true] = lab_inv.astype(np.int32)
    inv_pad[:n_true] = inv_cnt
    return b_pad, p_pad, lab_pad, inv_pad, n_true


def pixel_contrast_loss_seq_forward(feats, labels, rng):
    """PixelContrastLossSeq.forward.  feats: (B, C, H, W); labels: (B, H0, W0) int."""
    b, c, h, w = feats.shape
    labels_np = np.asarray(labels)
    labels_ds = _nearest_interp_pt(labels_np.astype(np.float32), h, w).astype(np.int64)
    y_hat = labels_ds.reshape(b, -1)

    sample = _random_anchor_sampling_indices(y_hat, rng)
    if sample is None:
        return None                     # mirrors the torch "not enough samples" early-out
    b_idx, p_idx, lab_idx, inv_cnt, n_true = sample
    return _contrast_loss_device(
        jnp.asarray(feats),
        jnp.asarray(np.array([n_true], dtype=np.int32)),
        jnp.asarray(b_idx), jnp.asarray(p_idx), jnp.asarray(lab_idx),
        jnp.asarray(inv_cnt))


def contrast_ce_loss_seq_forward(preds, target, rng):
    """ContrastCELossSeq.forward: 'seg' -> seg criterion, 'embed' -> pixel contrast."""
    if 'seg' in preds:
        # TODO(synk): FSCELoss / FSAuxRMILoss bodies are not part of the reference module;
        # only the 'embed' (pixel-contrast) branch is implemented here.
        raise NotImplementedError("'seg' branch (FSCELoss/FSAuxRMILoss) not provided")
    return pixel_contrast_loss_seq_forward(preds['embed'], target, rng)


# Pure NumPy (f64) reference of _contrastive() for the correctness check.
def _contrastive_ref(cf, lab):
    n = cf.shape[0]
    dots = cf @ cf.T / TEMPERATURE
    logits = dots - dots.max(axis=1, keepdims=True)
    mask = (lab[:, None] == lab[None, :]).astype(np.float64)
    neg_mask = 1.0 - mask
    mask = mask * (1.0 - np.eye(n))
    exp_logits = np.exp(logits)
    neg_logits = (exp_logits * neg_mask).sum(1, keepdims=True)
    log_prob = logits - np.log(exp_logits + neg_logits)
    mlpp = (mask * log_prob).sum(1) / mask.sum(1)
    return float(-(TEMPERATURE / BASE_TEMPERATURE) * mlpp.mean())


if __name__ == "__main__":
    key = jax.random.PRNGKey(0)
    kf, kl = jax.random.split(key, 2)

    B, C, H, W = 2, 32, 16, 16     # embed: NCHW projection-head features
    H0, W0 = 64, 64                # label map at original resolution
    NUM_CLASSES = 4

    feats = jax.random.normal(kf, (B, C, H, W), dtype=jnp.float32)
    # Projection-head embeddings are L2-normalized in the original pipeline; this also keeps
    # the f32 exp() path well inside range.
    feats = feats / (jnp.linalg.norm(feats, axis=1, keepdims=True) + 1e-12)
    labels = jax.random.randint(kl, (B, H0, W0), 0, NUM_CLASSES, dtype=jnp.int32)

    rng = np.random.default_rng(0)
    loss = contrast_ce_loss_seq_forward({'embed': feats}, labels, rng)
    assert loss is not None
    loss = jax.block_until_ready(loss)
    loss_val = float(loss)
    assert np.isfinite(loss_val), loss_val

    # ---- correctness check against a float64 NumPy reference on the same sampled indices ----
    rng_ref = np.random.default_rng(0)
    labels_ds = _nearest_interp_pt(np.asarray(labels).astype(np.float32), H, W)
    y_hat = labels_ds.astype(np.int64).reshape(B, -1)
    b_idx, p_idx, lab_idx, _inv_cnt, n_true = _random_anchor_sampling_indices(y_hat, rng_ref)
    feats_np = np.asarray(feats).astype(np.float64)
    feats_flat = feats_np.transpose(0, 2, 3, 1).reshape(B, H * W, C)
    cf = feats_flat[b_idx[:n_true], p_idx[:n_true]]
    lab = lab_idx[:n_true].astype(np.int64)
    ref = _contrastive_ref(cf, lab)
    # Tolerance covers f32 matmul / exp / log; the approximate reciprocal is gone.
    assert abs(loss_val - ref) <= 1e-2 * (1.0 + abs(ref)), (loss_val, ref)

    print("KERNEL_OK")
</pallas_src>

<mosaic_0001>
module attributes {stable_mosaic.version = 11 : i64} {
  func.func @_contrastive_kernel(%arg0: i32, %arg1: memref<1xi32, #tpu.memory_space<smem>>, %arg2: memref<128x32xf32, #tpu.memory_space<vmem>>, %arg3: memref<128x1xi32, #tpu.memory_space<vmem>>, %arg4: memref<1x128xi32, #tpu.memory_space<vmem>>, %arg5: memref<128x1xf32, #tpu.memory_space<vmem>>, %arg6: memref<1x1xf32, #tpu.memory_space<vmem>>) attributes {dimension_semantics = [#tpu.dimension_semantics<arbitrary>], iteration_bounds = array<i64: 1>, scalar_prefetch = 1 : i64, scratch_operands = 0 : i64, tpu.core_type = #tpu.core_type<tc>, window_params = [{pipeline_mode = #tpu.pipeline_mode<synchronous>, transform_indices = @transform_0, window_bounds = array<i64: 128, 32>}, {pipeline_mode = #tpu.pipeline_mode<synchronous>, transform_indices = @transform_1, window_bounds = array<i64: 128, 1>}, {pipeline_mode = #tpu.pipeline_mode<synchronous>, transform_indices = @transform_2, window_bounds = array<i64: 1, 128>}, {pipeline_mode = #tpu.pipeline_mode<synchronous>, transform_indices = @transform_3, window_bounds = array<i64: 128, 1>}, {pipeline_mode = #tpu.pipeline_mode<synchronous>, transform_indices = @transform_4, window_bounds = array<i64: 1, 1>}]} {
    %c0 = arith.constant 0 : index
    %0 = memref.load %arg1[%c0] : memref<1xi32, #tpu.memory_space<smem>>
    %1 = tpu.iota {dimensions = array<i32: 0>} : vector<128x1xi32>
    %2 = tpu.iota {dimensions = array<i32: 1>} : vector<1x128xi32>
    %3 = vector.broadcast %0 : i32 to vector<128x1xi32>
    %4 = arith.cmpi slt, %1, %3 : vector<128x1xi32>
    %5 = vector.broadcast %0 : i32 to vector<1x128xi32>
    %6 = arith.cmpi slt, %2, %5 : vector<1x128xi32>
    %c0_0 = arith.constant 0 : index
    %c0_1 = arith.constant 0 : index
    %7 = vector.load %arg2[%c0_0, %c0_1] : memref<128x32xf32, #tpu.memory_space<vmem>>, vector<128x32xf32>
    %cst = arith.constant 0.000000e+00 : f32
    %8 = vector.shape_cast %4 : vector<128x1xi1> to vector<128x1xi1>
    %9 = vector.broadcast %8 : vector<128x1xi1> to vector<128x32xi1>
    %10 = vector.broadcast %cst : f32 to vector<128x32xf32>
    %11 = arith.select %9, %7, %10 : vector<128x32xi1>, vector<128x32xf32>
    %cst_2 = arith.constant dense<0.000000e+00> : vector<128x128xf32>
    %12 = tpu.matmul %11, %11, %cst_2 {dimension_numbers = #tpu.dot_dimension_numbers<[1], [1], [0], [0], [0, 0, 1, 0], [], []>} : vector<128x32xf32>, vector<128x32xf32>, vector<128x128xf32> -> vector<128x128xf32>
    %cst_3 = arith.constant 1.000000e+01 : f32
    %13 = vector.broadcast %cst_3 : f32 to vector<128x128xf32>
    %14 = arith.mulf %12, %13 : vector<128x128xf32>
    %c0_4 = arith.constant 0 : index
    %c0_5 = arith.constant 0 : index
    %15 = vector.load %arg3[%c0_4, %c0_5] : memref<128x1xi32, #tpu.memory_space<vmem>>, vector<128x1xi32>
    %c0_6 = arith.constant 0 : index
    %c0_7 = arith.constant 0 : index
    %16 = vector.load %arg4[%c0_6, %c0_7] : memref<1x128xi32, #tpu.memory_space<vmem>>, vector<1x128xi32>
    %17 = vector.broadcast %15 : vector<128x1xi32> to vector<128x128xi32>
    %18 = vector.broadcast %16 : vector<1x128xi32> to vector<128x128xi32>
    %19 = arith.cmpi eq, %17, %18 : vector<128x128xi32>
    %cst_8 = arith.constant -3.000000e+38 : f32
    %20 = vector.shape_cast %6 : vector<1x128xi1> to vector<1x128xi1>
    %21 = vector.broadcast %20 : vector<1x128xi1> to vector<128x128xi1>
    %22 = vector.broadcast %cst_8 : f32 to vector<128x128xf32>
    %23 = arith.select %21, %14, %22 : vector<128x128xi1>, vector<128x128xf32>
    %cst_9 = arith.constant dense<0xFF800000> : vector<128xf32>
    %24 = vector.multi_reduction <maximumf>, %23, %cst_9 [1] : vector<128x128xf32> to vector<128xf32>
    %25 = vector.shape_cast %24 : vector<128xf32> to vector<128x1xf32>
    %26 = vector.broadcast %25 : vector<128x1xf32> to vector<128x128xf32>
    %27 = arith.subf %14, %26 : vector<128x128xf32>
    %28 = math.exp %27 : vector<128x128xf32>
    %cst_10 = arith.constant dense<true> : vector<128x128xi1>
    %29 = arith.xori %19, %cst_10 : vector<128x128xi1>
    %30 = vector.broadcast %6 : vector<1x128xi1> to vector<128x128xi1>
    %31 = arith.andi %30, %29 : vector<128x128xi1>
    %cst_11 = arith.constant 0.000000e+00 : f32
    %32 = vector.broadcast %cst_11 : f32 to vector<128x128xf32>
    %33 = arith.select %31, %28, %32 : vector<128x128xi1>, vector<128x128xf32>
    %cst_12 = arith.constant dense<0.000000e+00> : vector<128xf32>
    %34 = vector.multi_reduction <add>, %33, %cst_12 [1] : vector<128x128xf32> to vector<128xf32>
    %35 = vector.shape_cast %34 : vector<128xf32> to vector<128x1xf32>
    %36 = vector.broadcast %35 : vector<128x1xf32> to vector<128x128xf32>
    %37 = arith.addf %28, %36 : vector<128x128xf32>
    %38 = math.log %37 : vector<128x128xf32>
    %39 = arith.subf %27, %38 : vector<128x128xf32>
    %40 = vector.broadcast %1 : vector<128x1xi32> to vector<128x128xi32>
    %41 = vector.broadcast %2 : vector<1x128xi32> to vector<128x128xi32>
    %42 = arith.cmpi ne, %40, %41 : vector<128x128xi32>
    %43 = arith.andi %19, %42 : vector<128x128xi1>
    %cst_13 = arith.constant 0.000000e+00 : f32
    %44 = vector.broadcast %cst_13 : f32 to vector<128x128xf32>
    %45 = arith.select %43, %39, %44 : vector<128x128xi1>, vector<128x128xf32>
    %cst_14 = arith.constant dense<0.000000e+00> : vector<128xf32>
    %46 = vector.multi_reduction <add>, %45, %cst_14 [1] : vector<128x128xf32> to vector<128xf32>
    %47 = vector.shape_cast %46 : vector<128xf32> to vector<128x1xf32>
    %c0_15 = arith.constant 0 : index
    %c0_16 = arith.constant 0 : index
    %48 = vector.load %arg5[%c0_15, %c0_16] : memref<128x1xf32, #tpu.memory_space<vmem>>, vector<128x1xf32>
    %49 = arith.mulf %47, %48 : vector<128x1xf32>
    %cst_17 = arith.constant 0.000000e+00 : f32
    %50 = vector.broadcast %cst_17 : f32 to vector<128x1xf32>
    %51 = arith.select %4, %49, %50 : vector<128x1xi1>, vector<128x1xf32>
    %52 = vector.shape_cast %51 : vector<128x1xf32> to vector<1x128x1xf32>
    %cst_18 = arith.constant dense<0.000000e+00> : vector<1xf32>
    %53 = vector.multi_reduction <add>, %52, %cst_18 [1, 2] : vector<1x128x1xf32> to vector<1xf32>
    %54 = vector.shape_cast %53 : vector<1xf32> to vector<1x1x1xf32>
    %55 = vector.extract %54[0, 0, 0] : f32 from vector<1x1x1xf32>
    %cst_19 = arith.constant -1.42857146 : f32
    %56 = arith.mulf %cst_19, %55 : f32
    %57 = arith.sitofp %0 : i32 to f32
    %58 = arith.divf %56, %57 : f32
    %59 = vector.broadcast %58 : f32 to vector<1x1xf32>
    %c0_20 = arith.constant 0 : index
    %c0_21 = arith.constant 0 : index
    %60 = vector.load %arg6[%c0_20, %c0_21] : memref<1x1xf32, #tpu.memory_space<vmem>>, vector<1x1xf32>
    tpu.vector_store %arg6[%c0_20, %c0_21], %59 {strides = array<i32>} : memref<1x1xf32, #tpu.memory_space<vmem>>, vector<1x1xf32>,
    return
  }
  func.func @transform_0(%arg0: i32, %arg1: memref<1xi32, #tpu.memory_space<smem>>) -> (i32, i32) {
    %c0_i32 = arith.constant 0 : i32
    %c0_i32_0 = arith.constant 0 : i32
    %c0_i32_1 = arith.constant 0 : i32
    return %c0_i32, %c0_i32_0 : i32, i32
  }
  func.func @transform_1(%arg0: i32, %arg1: memref<1xi32, #tpu.memory_space<smem>>) -> (i32, i32) {
    %c0_i32 = arith.constant 0 : i32
    %c0_i32_0 = arith.constant 0 : i32
    %c0_i32_1 = arith.constant 0 : i32
    return %c0_i32, %c0_i32_0 : i32, i32
  }
  func.func @transform_2(%arg0: i32, %arg1: memref<1xi32, #tpu.memory_space<smem>>) -> (i32, i32) {
    %c0_i32 = arith.constant 0 : i32
    %c0_i32_0 = arith.constant 0 : i32
    %c0_i32_1 = arith.constant 0 : i32
    return %c0_i32, %c0_i32_0 : i32, i32
  }
  func.func @transform_3(%arg0: i32, %arg1: memref<1xi32, #tpu.memory_space<smem>>) -> (i32, i32) {
    %c0_i32 = arith.constant 0 : i32
    %c0_i32_0 = arith.constant 0 : i32
    %c0_i32_1 = arith.constant 0 : i32
    return %c0_i32, %c0_i32_0 : i32, i32
  }
  func.func @transform_4(%arg0: i32, %arg1: memref<1xi32, #tpu.memory_space<smem>>) -> (i32, i32) {
    %c0_i32 = arith.constant 0 : i32
    %c0_i32_0 = arith.constant 0 : i32
    %c0_i32_1 = arith.constant 0 : i32
    return %c0_i32, %c0_i32_0 : i32, i32
  }
}

</mosaic_0001>

<llo_original>
// kernel: _contrast_loss_device.1
$region0: #{_contrast_loss_device.1}
  #allocation0 [shape = 'u32[]', space=smem, size = 0x4, offset = 0x4, fixed_abs, tag = 'smem constant byte address 0x4 - core index']
  #allocation1 [shape = 'u32[144,128]{1,0:T(1,128)}', space=vmem, size = 0x12000, scoped, tag = 'internal scratch']
  #allocation2 [shape = 's32[1]{0}', space=sflag, size = 0x4, scoped, tag = 'scoped memory for _contrast_loss_device.1']
  #allocation3 [shape = 's32[1]{0:T(128)S(6)}', space=smem, size = 0x200, scoped, tag = 'prefetched SMEM operand 0']
  %s0 = inlined_call_operand.<no memory space> [shape: s32[1], index: 0, kind: input, shape index: {}]
  %s1 = inlined_call_operand.vmem [shape: f32[128,32], index: 1, kind: input, shape index: {}]
  %s2 = inlined_call_operand.vmem [shape: s32[128,1], index: 2, kind: input, shape index: {}]
  %s3 = inlined_call_operand.vmem [shape: s32[1,128], index: 3, kind: input, shape index: {}]
  %s4 = inlined_call_operand.vmem [shape: f32[128,1], index: 4, kind: input, shape index: {}]
  %s5 = inlined_call_operand.hbm [shape: f32[1,1], index: 5, kind: output, shape index: {}]
  %s6 = sld [smem:[#allocation0]]
  $region26: #{_contrast_loss_device.1} parent=0
    _
  %s8 = ssub.s32 1, %s6
  %s9 = scalar_select 0, %s8, %s6
  %10 = sst [smem:[#allocation3]] %s0
  $region1: #{_contrast_loss_device.1} parent=0
    #allocation4 [shape = 'u8[512]{0}', space=vmem, size = 0x400, scoped, tag = 'output window, operand 0, single buffered']
    #allocation5 [shape = 's32[1]{0}', space=sflag, size = 0x4, scoped, tag = 'scoped memory for _contrast_loss_device.1']
    %11 = vsyncpa [#allocation5], 0
    // Predicated region
    $region2: #{_contrast_loss_device.1} parent=1 // pred_check
      _
    $region3: #{_contrast_loss_device.1} parent=1 // pred_check_branch
      %13 = sbr.rel (0) target = $region5
    $region4: #{_contrast_loss_device.1} parent=1 // pred_region
      _
    $region5: #{_contrast_loss_device.1} parent=1 // pred_fallthru
      _
    // Predicated region
    $region6: #{_contrast_loss_device.1} parent=1 // pred_check
      _
    $region7: #{_contrast_loss_device.1} parent=1 // pred_check_branch
      %15 = sbr.rel (0) target = $region9
    $region8: #{_contrast_loss_device.1} parent=1 // pred_region
      _
    $region9: #{_contrast_loss_device.1} parent=1 // pred_fallthru
      _
    // Predicated region
    $region10: #{_contrast_loss_device.1} parent=1 // pred_check
      _
    $region11: #{_contrast_loss_device.1} parent=1 // pred_check_branch
      %17 = sbr.rel (0) target = $region13
    $region12: #{_contrast_loss_device.1} parent=1 // pred_region
      _
    $region13: #{_contrast_loss_device.1} parent=1 // pred_fallthru
      _
    // Predicated region
    $region14: #{_contrast_loss_device.1} parent=1 // pred_check
      _
    $region15: #{_contrast_loss_device.1} parent=1 // pred_check_branch
      %19 = sbr.rel (0) target = $region17
    $region16: #{_contrast_loss_device.1} parent=1 // pred_region
      _
    $region17: #{_contrast_loss_device.1} parent=1 // pred_fallthru
      _
    %s20 = sld [smem:[#allocation3]]
    %v21 = vlaneseq
    %v22 = vshrl.u32 %v21, 7
    %v23 = vadd.s32 %v22, 8
    %v24 = vadd.s32 %v22, 16
    %v25 = vadd.s32 %v22, 24
    %v26 = vadd.s32 %v22, 32
    %v27 = vadd.s32 %v22, 40
    %v28 = vadd.s32 %v22, 48
    %v29 = vadd.s32 %v22, 56
    %v30 = vadd.s32 %v22, 64
    %v31 = vadd.s32 %v22, 72
    %v32 = vadd.s32 %v22, 80
    %v33 = vadd.s32 %v22, 88
    %v34 = vadd.s32 %v22, 96
    %v35 = vadd.s32 %v22, 104
    %v36 = vadd.s32 %v22, 112
    %v37 = vadd.s32 %v22, 120
    %v38 = vlaneseq
    %v39 = vand.u32 %v38, 127
    %v40 = vstv %s20
    %vm41 = vcmp.lt.s32.totalorder %v22, %v40
    %vm42 = vcmp.lt.s32.totalorder %v23, %v40
    %vm43 = vcmp.lt.s32.totalorder %v24, %v40
    %vm44 = vcmp.lt.s32.totalorder %v25, %v40
    %vm45 = vcmp.lt.s32.totalorder %v26, %v40
    %vm46 = vcmp.lt.s32.totalorder %v27, %v40
    %vm47 = vcmp.lt.s32.totalorder %v28, %v40
    %vm48 = vcmp.lt.s32.totalorder %v29, %v40
    %vm49 = vcmp.lt.s32.totalorder %v30, %v40
    %vm50 = vcmp.lt.s32.totalorder %v31, %v40
    %vm51 = vcmp.lt.s32.totalorder %v32, %v40
    %vm52 = vcmp.lt.s32.totalorder %v33, %v40
    %vm53 = vcmp.lt.s32.totalorder %v34, %v40
    %vm54 = vcmp.lt.s32.totalorder %v35, %v40
    %vm55 = vcmp.lt.s32.totalorder %v36, %v40
    %vm56 = vcmp.lt.s32.totalorder %v37, %v40
    %vm57 = vcmp.lt.s32.totalorder %v39, %v40
    %v58 = vld [vmem:[%s1] sm:$0xff]
    %v59 = vld [vmem:[%s1 + $0x8] sm:$0xff]
    %v60 = vld [vmem:[%s1 + $0x10] sm:$0xff]
    %v61 = vld [vmem:[%s1 + $0x18] sm:$0xff]
    %v62 = vld [vmem:[%s1 + $0x20] sm:$0xff]
    %v63 = vld [vmem:[%s1 + $0x28] sm:$0xff]
    %v64 = vld [vmem:[%s1 + $0x30] sm:$0xff]
    %v65 = vld [vmem:[%s1 + $0x38] sm:$0xff]
    %v66 = vld [vmem:[%s1 + $0x40] sm:$0xff]
    %v67 = vld [vmem:[%s1 + $0x48] sm:$0xff]
    %v68 = vld [vmem:[%s1 + $0x50] sm:$0xff]
    %v69 = vld [vmem:[%s1 + $0x58] sm:$0xff]
    %v70 = vld [vmem:[%s1 + $0x60] sm:$0xff]
    %v71 = vld [vmem:[%s1 + $0x68] sm:$0xff]
    %v72 = vld [vmem:[%s1 + $0x70] sm:$0xff]
    %v73 = vld [vmem:[%s1 + $0x78] sm:$0xff]
    %v74 = vsel %vm41, 1, 0
    %v75 = vsel %vm42, 1, 0
    %v76 = vsel %vm43, 1, 0
    %v77 = vsel %vm44, 1, 0
    %v78 = vsel %vm45, 1, 0
    %v79 = vsel %vm46, 1, 0
    %v80 = vsel %vm47, 1, 0
    %v81 = vsel %vm48, 1, 0
    %v82 = vsel %vm49, 1, 0
    %v83 = vsel %vm50, 1, 0
    %v84 = vsel %vm51, 1, 0
    %v85 = vsel %vm52, 1, 0
    %v86 = vsel %vm53, 1, 0
    %v87 = vsel %vm54, 1, 0
    %v88 = vsel %vm55, 1, 0
    %v89 = vsel %vm56, 1, 0
    %vm90 = vcmp.eq.s32.totalorder %v74, 1
    %vm91 = vcmp.eq.s32.totalorder %v75, 1
    %vm92 = vcmp.eq.s32.totalorder %v76, 1
    %vm93 = vcmp.eq.s32.totalorder %v77, 1
    %vm94 = vcmp.eq.s32.totalorder %v78, 1
    %vm95 = vcmp.eq.s32.totalorder %v79, 1
    %vm96 = vcmp.eq.s32.totalorder %v80, 1
    %vm97 = vcmp.eq.s32.totalorder %v81, 1
    %vm98 = vcmp.eq.s32.totalorder %v82, 1
    %vm99 = vcmp.eq.s32.totalorder %v83, 1
    %vm100 = vcmp.eq.s32.totalorder %v84, 1
    %vm101 = vcmp.eq.s32.totalorder %v85, 1
    %vm102 = vcmp.eq.s32.totalorder %v86, 1
    %vm103 = vcmp.eq.s32.totalorder %v87, 1
    %vm104 = vcmp.eq.s32.totalorder %v88, 1
    %vm105 = vcmp.eq.s32.totalorder %v89, 1
    %v106 = vsel %vm90, %v58, 0.0
    %v107 = vsel %vm91, %v59, 0.0
    %v108 = vsel %vm92, %v60, 0.0
    %v109 = vsel %vm93, %v61, 0.0
    %v110 = vsel %vm94, %v62, 0.0
    %v111 = vsel %vm95, %v63, 0.0
    %v112 = vsel %vm96, %v64, 0.0
    %v113 = vsel %vm97, %v65, 0.0
    %v114 = vsel %vm98, %v66, 0.0
    %v115 = vsel %vm99, %v67, 0.0
    %v116 = vsel %vm100, %v68, 0.0
    %v117 = vsel %vm101, %v69, 0.0
    %v118 = vsel %vm102, %v70, 0.0
    %v119 = vsel %vm103, %v71, 0.0
    %v120 = vsel %vm104, %v72, 0.0
    %v121 = vsel %vm105, %v73, 0.0
    %vm122 = vcmask 261120
    %v124 = vsel %vm122, %v106, 0
    %v127 = vsel %vm122, %v107, 0
    %v130 = vsel %vm122, %v108, 0
    %v133 = vsel %vm122, %v109, 0
    %v136 = vsel %vm122, %v110, 0
    %v139 = vsel %vm122, %v111, 0
    %v142 = vsel %vm122, %v112, 0
    %v145 = vsel %vm122, %v113, 0
    %v148 = vsel %vm122, %v114, 0
    %v151 = vsel %vm122, %v115, 0
    %v154 = vsel %vm122, %v116, 0
    %v157 = vsel %vm122, %v117, 0
    %v160 = vsel %vm122, %v118, 0
    %v163 = vsel %vm122, %v119, 0
    %v166 = vsel %vm122, %v120, 0
    %v169 = vsel %vm122, %v121, 0
    %171 = vmatprep.subr.mxu0 0.0
    %172 = vmatpush1.xpose.msra.mxu0 %v124
    %173 = vmatprep.subr.mxu0 0.0
    %174 = vmatpush1.xpose.msra.mxu0 %v127
    %175 = vmatprep.subr.mxu0 0.0
    %176 = vmatpush1.xpose.msra.mxu0 %v130
    %177 = vmatprep.subr.mxu0 0.0
    %178 = vmatpush1.xpose.msra.mxu0 %v133
    %179 = vmatprep.subr.mxu0 0.0
    %180 = vmatpush1.xpose.msra.mxu0 %v136
    %181 = vmatprep.subr.mxu0 0.0
    %182 = vmatpush1.xpose.msra.mxu0 %v139
    %183 = vmatprep.subr.mxu0 0.0
    %184 = vmatpush1.xpose.msra.mxu0 %v142
    %185 = vmatprep.subr.mxu0 0.0
    %186 = vmatpush1.xpose.msra.mxu0 %v145
    %187 = vmatprep.subr.mxu0 0.0
    %188 = vmatpush1.xpose.msra.mxu0 %v148
    %189 = vmatprep.subr.mxu0 0.0
    %190 = vmatpush1.xpose.msra.mxu0 %v151
    %191 = vmatprep.subr.mxu0 0.0
    %192 = vmatpush1.xpose.msra.mxu0 %v154
    %193 = vmatprep.subr.mxu0 0.0
    %194 = vmatpush1.xpose.msra.mxu0 %v157
    %195 = vmatprep.subr.mxu0 0.0
    %196 = vmatpush1.xpose.msra.mxu0 %v160
    %197 = vmatprep.subr.mxu0 0.0
    %198 = vmatpush1.xpose.msra.mxu0 %v163
    %199 = vmatprep.subr.mxu0 0.0
    %200 = vmatpush1.xpose.msra.mxu0 %v166
    %201 = vmatprep.subr.mxu0 0.0
    %202 = vmatpush1.xpose.msra.mxu0 %v169
    %203 = vmatprep.subr.mxu0 0.0
    %204 = vmatpush1.xpose.msra.mxu0 0.0
    %205 = vmatprep.subr.mxu0 0.0
    %206 = vmatpush1.xpose.msra.mxu0 0.0
    %207 = vmatprep.subr.mxu0 0.0
    %208 = vmatpush1.xpose.msra.mxu0 0.0
    %209 = vmatprep.subr.mxu0 0.0
    %210 = vmatpush1.xpose.msra.mxu0 0.0
    %211 = vmatprep.subr.mxu0 0.0
    %212 = vmatpush1.xpose.msra.mxu0 0.0
    %213 = vmatprep.subr.mxu0 0.0
    %214 = vmatpush1.xpose.msra.mxu0 0.0
    %215 = vmatprep.subr.mxu0 0.0
    %216 = vmatpush1.xpose.msra.mxu0 0.0
    %217 = vmatprep.subr.mxu0 0.0
    %218 = vmatpush1.xpose.msra.mxu0 0.0
    %219 = vmatprep.subr.mxu0 0.0
    %220 = vmatpush1.xpose.msra.mxu0 0.0
    %221 = vmatprep.subr.mxu0 0.0
    %222 = vmatpush1.xpose.msra.mxu0 0.0
    %223 = vmatprep.subr.mxu0 0.0
    %224 = vmatpush1.xpose.msra.mxu0 0.0
    %225 = vmatprep.subr.mxu0 0.0
    %226 = vmatpush1.xpose.msra.mxu0 0.0
    %227 = vmatprep.subr.mxu0 0.0
    %228 = vmatpush1.xpose.msra.mxu0 0.0
    %229 = vmatprep.subr.mxu0 0.0
    %230 = vmatpush1.xpose.msra.mxu0 0.0
    %231 = vmatprep.subr.mxu0 0.0
    %232 = vmatpush1.xpose.msra.mxu0 0.0
    %233 = vmatprep.subr.mxu0 0.0
    %234 = vmatpush1.xpose.msra.mxu0 0.0
    %235 = vmatprep.mubr.f32.mxu0 0.0
    %236 = vmatmul.mubr.f32.gmra.mrb[0].mxu0 %v124
    %v237 = vpop.f32.mrb[0].mxu0
    %v238 = vadd.f32 0.0, %v237
    %v239 = vpop.f32.mrb[0].mxu0
    %240 = vmatprep.mubr.f32.mxu0 0.0
    %241 = vmatmul.mubr.f32.gmra.mrb[0].mxu0 %v127
    %v242 = vpop.f32.mrb[0].mxu0
    %v243 = vadd.f32 0.0, %v242
    %v244 = vpop.f32.mrb[0].mxu0
    %245 = vmatprep.mubr.f32.mxu0 0.0
    %246 = vmatmul.mubr.f32.gmra.mrb[0].mxu0 %v130
    %v247 = vpop.f32.mrb[0].mxu0
    %v248 = vadd.f32 0.0, %v247
    %v249 = vpop.f32.mrb[0].mxu0
    %250 = vmatprep.mubr.f32.mxu0 0.0
    %251 = vmatmul.mubr.f32.gmra.mrb[0].mxu0 %v133
    %v252 = vpop.f32.mrb[0].mxu0
    %v253 = vadd.f32 0.0, %v252
    %v254 = vpop.f32.mrb[0].mxu0
    %255 = vmatprep.mubr.f32.mxu0 0.0
    %256 = vmatmul.mubr.f32.gmra.mrb[0].mxu0 %v136
    %v257 = vpop.f32.mrb[0].mxu0
    %v258 = vadd.f32 0.0, %v257
    %v259 = vpop.f32.mrb[0].mxu0
    %260 = vmatprep.mubr.f32.mxu0 0.0
    %261 = vmatmul.mubr.f32.gmra.mrb[0].mxu0 %v139
    %v262 = vpop.f32.mrb[0].mxu0
    %v263 = vadd.f32 0.0, %v262
    %v264 = vpop.f32.mrb[0].mxu0
    %265 = vmatprep.mubr.f32.mxu0 0.0
    %266 = vmatmul.mubr.f32.gmra.mrb[0].mxu0 %v142
    %v267 = vpop.f32.mrb[0].mxu0
    %v268 = vadd.f32 0.0, %v267
    %v269 = vpop.f32.mrb[0].mxu0
    %270 = vmatprep.mubr.f32.mxu0 0.0
    %271 = vmatmul.mubr.f32.gmra.mrb[0].mxu0 %v145
    %v272 = vpop.f32.mrb[0].mxu0
    %v273 = vadd.f32 0.0, %v272
    %v274 = vpop.f32.mrb[0].mxu0
    %275 = vmatprep.mubr.f32.mxu0 0.0
    %276 = vmatmul.mubr.f32.gmra.mrb[0].mxu0 %v148
    %v277 = vpop.f32.mrb[0].mxu0
    %v278 = vadd.f32 0.0, %v277
    %v279 = vpop.f32.mrb[0].mxu0
    %280 = vmatprep.mubr.f32.mxu0 0.0
    %281 = vmatmul.mubr.f32.gmra.mrb[0].mxu0 %v151
    %v282 = vpop.f32.mrb[0].mxu0
    %v283 = vadd.f32 0.0, %v282
    %v284 = vpop.f32.mrb[0].mxu0
    %285 = vmatprep.mubr.f32.mxu0 0.0
    %286 = vmatmul.mubr.f32.gmra.mrb[0].mxu0 %v154
    %v287 = vpop.f32.mrb[0].mxu0
    %v288 = vadd.f32 0.0, %v287
    %v289 = vpop.f32.mrb[0].mxu0
    %290 = vmatprep.mubr.f32.mxu0 0.0
    %291 = vmatmul.mubr.f32.gmra.mrb[0].mxu0 %v157
    %v292 = vpop.f32.mrb[0].mxu0
    %v293 = vadd.f32 0.0, %v292
    %v294 = vpop.f32.mrb[0].mxu0
    %295 = vmatprep.mubr.f32.mxu0 0.0
    %296 = vmatmul.mubr.f32.gmra.mrb[0].mxu0 %v160
    %v297 = vpop.f32.mrb[0].mxu0
    %v298 = vadd.f32 0.0, %v297
    %v299 = vpop.f32.mrb[0].mxu0
    %300 = vmatprep.mubr.f32.mxu0 0.0
    %301 = vmatmul.mubr.f32.gmra.mrb[0].mxu0 %v163
    %v302 = vpop.f32.mrb[0].mxu0
    %v303 = vadd.f32 0.0, %v302
    %v304 = vpop.f32.mrb[0].mxu0
    %305 = vmatprep.mubr.f32.mxu0 0.0
    %306 = vmatmul.mubr.f32.gmra.mrb[0].mxu0 %v166
    %v307 = vpop.f32.mrb[0].mxu0
    %v308 = vadd.f32 0.0, %v307
    %v309 = vpop.f32.mrb[0].mxu0
    %310 = vmatprep.mubr.f32.mxu0 0.0
    %311 = vmatmul.mubr.f32.gmra.mrb[0].mxu0 %v169
    %v312 = vpop.f32.mrb[0].mxu0
    %v313 = vadd.f32 0.0, %v312
    %v314 = vpop.f32.mrb[0].mxu0
    %315 = vdwg.mxu0
    %v316 = vmul.f32 %v238, 10.0
    %v317 = vmul.f32 %v243, 10.0
    %v318 = vmul.f32 %v248, 10.0
    %v319 = vmul.f32 %v253, 10.0
    %v320 = vmul.f32 %v258, 10.0
    %v321 = vmul.f32 %v263, 10.0
    %v322 = vmul.f32 %v268, 10.0
    %v323 = vmul.f32 %v273, 10.0
    %v324 = vmul.f32 %v278, 10.0
    %v325 = vmul.f32 %v283, 10.0
    %v326 = vmul.f32 %v288, 10.0
    %v327 = vmul.f32 %v293, 10.0
    %v328 = vmul.f32 %v298, 10.0
    %v329 = vmul.f32 %v303, 10.0
    %v330 = vmul.f32 %v308, 10.0
    %v331 = vmul.f32 %v313, 10.0
    %v332 = vld [vmem:[%s2] sm:$0xff]
    %v333 = vld [vmem:[%s2 + $0x8] sm:$0xff]
    %v334 = vld [vmem:[%s2 + $0x10] sm:$0xff]
    %v335 = vld [vmem:[%s2 + $0x18] sm:$0xff]
    %v336 = vld [vmem:[%s2 + $0x20] sm:$0xff]
    %v337 = vld [vmem:[%s2 + $0x28] sm:$0xff]
    %v338 = vld [vmem:[%s2 + $0x30] sm:$0xff]
    %v339 = vld [vmem:[%s2 + $0x38] sm:$0xff]
    %v340 = vld [vmem:[%s2 + $0x40] sm:$0xff]
    %v341 = vld [vmem:[%s2 + $0x48] sm:$0xff]
    %v342 = vld [vmem:[%s2 + $0x50] sm:$0xff]
    %v343 = vld [vmem:[%s2 + $0x58] sm:$0xff]
    %v344 = vld [vmem:[%s2 + $0x60] sm:$0xff]
    %v345 = vld [vmem:[%s2 + $0x68] sm:$0xff]
    %v346 = vld [vmem:[%s2 + $0x70] sm:$0xff]
    %v347 = vld [vmem:[%s2 + $0x78] sm:$0xff]
    %v348 = vld [vmem:[%s3] sm:$0x1]
    %349 = vset.pattern.permute.xlu0 0
    %350 = vperm.xlu0 %349, %v332
    %v351 = vpop.permute.xlu0 %350
    %352 = vset.pattern.permute.xlu0 0
    %353 = vperm.xlu0 %352, %v333
    %v354 = vpop.permute.xlu0 %353
    %355 = vset.pattern.permute.xlu0 0
    %356 = vperm.xlu0 %355, %v334
    %v357 = vpop.permute.xlu0 %356
    %358 = vset.pattern.permute.xlu0 0
    %359 = vperm.xlu0 %358, %v335
    %v360 = vpop.permute.xlu0 %359
    %361 = vset.pattern.permute.xlu0 0
    %362 = vperm.xlu0 %361, %v336
    %v363 = vpop.permute.xlu0 %362
    %364 = vset.pattern.permute.xlu0 0
    %365 = vperm.xlu0 %364, %v337
    %v366 = vpop.permute.xlu0 %365
    %367 = vset.pattern.permute.xlu0 0
    %368 = vperm.xlu0 %367, %v338
    %v369 = vpop.permute.xlu0 %368
    %370 = vset.pattern.permute.xlu0 0
    %371 = vperm.xlu0 %370, %v339
    %v372 = vpop.permute.xlu0 %371
    %373 = vset.pattern.permute.xlu0 0
    %374 = vperm.xlu0 %373, %v340
    %v375 = vpop.permute.xlu0 %374
    %376 = vset.pattern.permute.xlu0 0
    %377 = vperm.xlu0 %376, %v341
    %v378 = vpop.permute.xlu0 %377
    %379 = vset.pattern.permute.xlu0 0
    %380 = vperm.xlu0 %379, %v342
    %v381 = vpop.permute.xlu0 %380
    %382 = vset.pattern.permute.xlu0 0
    %383 = vperm.xlu0 %382, %v343
    %v384 = vpop.permute.xlu0 %383
    %385 = vset.pattern.permute.xlu0 0
    %386 = vperm.xlu0 %385, %v344
    %v387 = vpop.permute.xlu0 %386
    %388 = vset.pattern.permute.xlu0 0
    %389 = vperm.xlu0 %388, %v345
    %v390 = vpop.permute.xlu0 %389
    %391 = vset.pattern.permute.xlu0 0
    %392 = vperm.xlu0 %391, %v346
    %v393 = vpop.permute.xlu0 %392
    %394 = vset.pattern.permute.xlu0 0
    %395 = vperm.xlu0 %394, %v347
    %v396 = vpop.permute.xlu0 %395
    %v397 = vlaneseq
    %v398 = vshrl.u32 %v397, 7
    %v399 = vsub.s32 0, %v398
    %v400 = vrot.slane %v348, %v399
    %vm401 = vcmp.eq.s32.totalorder %v351, %v400
    %vm402 = vcmp.eq.s32.totalorder %v354, %v400
    %vm403 = vcmp.eq.s32.totalorder %v357, %v400
    %vm404 = vcmp.eq.s32.totalorder %v360, %v400
    %vm405 = vcmp.eq.s32.totalorder %v363, %v400
    %vm406 = vcmp.eq.s32.totalorder %v366, %v400
    %vm407 = vcmp.eq.s32.totalorder %v369, %v400
    %vm408 = vcmp.eq.s32.totalorder %v372, %v400
    %vm409 = vcmp.eq.s32.totalorder %v375, %v400
    %vm410 = vcmp.eq.s32.totalorder %v378, %v400
    %vm411 = vcmp.eq.s32.totalorder %v381, %v400
    %vm412 = vcmp.eq.s32.totalorder %v384, %v400
    %vm413 = vcmp.eq.s32.totalorder %v387, %v400
    %vm414 = vcmp.eq.s32.totalorder %v390, %v400
    %vm415 = vcmp.eq.s32.totalorder %v393, %v400
    %vm416 = vcmp.eq.s32.totalorder %v396, %v400
    %v417 = vsel %vm57, 1, 0
    %vm418 = vcmp.eq.s32.totalorder %v417, 1
    %v419 = vsel %vm418, %v316, -3e+38
    %v420 = vsel %vm418, %v317, -3e+38
    %v421 = vsel %vm418, %v318, -3e+38
    %v422 = vsel %vm418, %v319, -3e+38
    %v423 = vsel %vm418, %v320, -3e+38
    %v424 = vsel %vm418, %v321, -3e+38
    %v425 = vsel %vm418, %v322, -3e+38
    %v426 = vsel %vm418, %v323, -3e+38
    %v427 = vsel %vm418, %v324, -3e+38
    %v428 = vsel %vm418, %v325, -3e+38
    %v429 = vsel %vm418, %v326, -3e+38
    %v430 = vsel %vm418, %v327, -3e+38
    %v431 = vsel %vm418, %v328, -3e+38
    %v432 = vsel %vm418, %v329, -3e+38
    %v433 = vsel %vm418, %v330, -3e+38
    %v434 = vsel %vm418, %v331, -3e+38
    %435 = vmax.xlane.f32.xlu0 %v419
    %v436 = vpop.xlane.xlu0 %435
    %437 = vmax.xlane.f32.xlu0 %v420
    %v438 = vpop.xlane.xlu0 %437
    %439 = vmax.xlane.f32.xlu0 %v421
    %v440 = vpop.xlane.xlu0 %439
    %441 = vmax.xlane.f32.xlu0 %v422
    %v442 = vpop.xlane.xlu0 %441
    %443 = vmax.xlane.f32.xlu0 %v423
    %v444 = vpop.xlane.xlu0 %443
    %445 = vmax.xlane.f32.xlu0 %v424
    %v446 = vpop.xlane.xlu0 %445
    %447 = vmax.xlane.f32.xlu0 %v425
    %v448 = vpop.xlane.xlu0 %447
    %449 = vmax.xlane.f32.xlu0 %v426
    %v450 = vpop.xlane.xlu0 %449
    %451 = vmax.xlane.f32.xlu0 %v427
    %v452 = vpop.xlane.xlu0 %451
    %453 = vmax.xlane.f32.xlu0 %v428
    %v454 = vpop.xlane.xlu0 %453
    %455 = vmax.xlane.f32.xlu0 %v429
    %v456 = vpop.xlane.xlu0 %455
    %457 = vmax.xlane.f32.xlu0 %v430
    %v458 = vpop.xlane.xlu0 %457
    %459 = vmax.xlane.f32.xlu0 %v431
    %v460 = vpop.xlane.xlu0 %459
    %461 = vmax.xlane.f32.xlu0 %v432
    %v462 = vpop.xlane.xlu0 %461
    %463 = vmax.xlane.f32.xlu0 %v433
    %v464 = vpop.xlane.xlu0 %463
    %465 = vmax.xlane.f32.xlu0 %v434
    %v466 = vpop.xlane.xlu0 %465
    %v467 = vsub.f32 %v316, %v436
    %v468 = vsub.f32 %v317, %v438
    %v469 = vsub.f32 %v318, %v440
    %v470 = vsub.f32 %v319, %v442
    %v471 = vsub.f32 %v320, %v444
    %v472 = vsub.f32 %v321, %v446
    %v473 = vsub.f32 %v322, %v448
    %v474 = vsub.f32 %v323, %v450
    %v475 = vsub.f32 %v324, %v452
    %v476 = vsub.f32 %v325, %v454
    %v477 = vsub.f32 %v326, %v456
    %v478 = vsub.f32 %v327, %v458
    %v479 = vsub.f32 %v328, %v460
    %v480 = vsub.f32 %v329, %v462
    %v481 = vsub.f32 %v330, %v464
    %v482 = vsub.f32 %v331, %v466
    %v483 = vmul.f32 %v467, 1.442695
    %v484 = vpow.pop %v483
    %v485 = vmul.f32 %v468, 1.442695
    %v486 = vpow.pop %v485
    %v487 = vmul.f32 %v469, 1.442695
    %v488 = vpow.pop %v487
    %v489 = vmul.f32 %v470, 1.442695
    %v490 = vpow.pop %v489
    %v491 = vmul.f32 %v471, 1.442695
    %v492 = vpow.pop %v491
    %v493 = vmul.f32 %v472, 1.442695
    %v494 = vpow.pop %v493
    %v495 = vmul.f32 %v473, 1.442695
    %v496 = vpow.pop %v495
    %v497 = vmul.f32 %v474, 1.442695
    %v498 = vpow.pop %v497
    %v499 = vmul.f32 %v475, 1.442695
    %v500 = vpow.pop %v499
    %v501 = vmul.f32 %v476, 1.442695
    %v502 = vpow.pop %v501
    %v503 = vmul.f32 %v477, 1.442695
    %v504 = vpow.pop %v503
    %v505 = vmul.f32 %v478, 1.442695
    %v506 = vpow.pop %v505
    %v507 = vmul.f32 %v479, 1.442695
    %v508 = vpow.pop %v507
    %v509 = vmul.f32 %v480, 1.442695
    %v510 = vpow.pop %v509
    %v511 = vmul.f32 %v481, 1.442695
    %v512 = vpow.pop %v511
    %v513 = vmul.f32 %v482, 1.442695
    %v514 = vpow.pop %v513
    %vm515 = vmxor %vm401, 1
    %vm516 = vmxor %vm402, 1
    %vm517 = vmxor %vm403, 1
    %vm518 = vmxor %vm404, 1
    %vm519 = vmxor %vm405, 1
    %vm520 = vmxor %vm406, 1
    %vm521 = vmxor %vm407, 1
    %vm522 = vmxor %vm408, 1
    %vm523 = vmxor %vm409, 1
    %vm524 = vmxor %vm410, 1
    %vm525 = vmxor %vm411, 1
    %vm526 = vmxor %vm412, 1
    %vm527 = vmxor %vm413, 1
    %vm528 = vmxor %vm414, 1
    %vm529 = vmxor %vm415, 1
    %vm530 = vmxor %vm416, 1
    %vm531 = vmand %vm418, %vm515
    %vm532 = vmand %vm418, %vm516
    %vm533 = vmand %vm418, %vm517
    %vm534 = vmand %vm418, %vm518
    %vm535 = vmand %vm418, %vm519
    %vm536 = vmand %vm418, %vm520
    %vm537 = vmand %vm418, %vm521
    %vm538 = vmand %vm418, %vm522
    %vm539 = vmand %vm418, %vm523
    %vm540 = vmand %vm418, %vm524
    %vm541 = vmand %vm418, %vm525
    %vm542 = vmand %vm418, %vm526
    %vm543 = vmand %vm418, %vm527
    %vm544 = vmand %vm418, %vm528
    %vm545 = vmand %vm418, %vm529
    %vm546 = vmand %vm418, %vm530
    %v547 = vsel %vm531, %v484, 0.0
    %v548 = vsel %vm532, %v486, 0.0
    %v549 = vsel %vm533, %v488, 0.0
    %v550 = vsel %vm534, %v490, 0.0
    %v551 = vsel %vm535, %v492, 0.0
    %v552 = vsel %vm536, %v494, 0.0
    %v553 = vsel %vm537, %v496, 0.0
    %v554 = vsel %vm538, %v498, 0.0
    %v555 = vsel %vm539, %v500, 0.0
    %v556 = vsel %vm540, %v502, 0.0
    %v557 = vsel %vm541, %v504, 0.0
    %v558 = vsel %vm542, %v506, 0.0
    %v559 = vsel %vm543, %v508, 0.0
    %v560 = vsel %vm544, %v510, 0.0
    %v561 = vsel %vm545, %v512, 0.0
    %v562 = vsel %vm546, %v514, 0.0
    %563 = vadd.xlane.f32.xlu0 %v547
    %v564 = vpop.xlane.xlu0 %563
    %565 = vadd.xlane.f32.xlu0 %v548
    %v566 = vpop.xlane.xlu0 %565
    %567 = vadd.xlane.f32.xlu0 %v549
    %v568 = vpop.xlane.xlu0 %567
    %569 = vadd.xlane.f32.xlu0 %v550
    %v570 = vpop.xlane.xlu0 %569
    %571 = vadd.xlane.f32.xlu0 %v551
    %v572 = vpop.xlane.xlu0 %571
    %573 = vadd.xlane.f32.xlu0 %v552
    %v574 = vpop.xlane.xlu0 %573
    %575 = vadd.xlane.f32.xlu0 %v553
    %v576 = vpop.xlane.xlu0 %575
    %577 = vadd.xlane.f32.xlu0 %v554
    %v578 = vpop.xlane.xlu0 %577
    %579 = vadd.xlane.f32.xlu0 %v555
    %v580 = vpop.xlane.xlu0 %579
    %581 = vadd.xlane.f32.xlu0 %v556
    %v582 = vpop.xlane.xlu0 %581
    %583 = vadd.xlane.f32.xlu0 %v557
    %v584 = vpop.xlane.xlu0 %583
    %585 = vadd.xlane.f32.xlu0 %v558
    %v586 = vpop.xlane.xlu0 %585
    %587 = vadd.xlane.f32.xlu0 %v559
    %v588 = vpop.xlane.xlu0 %587
    %589 = vadd.xlane.f32.xlu0 %v560
    %v590 = vpop.xlane.xlu0 %589
    %591 = vadd.xlane.f32.xlu0 %v561
    %v592 = vpop.xlane.xlu0 %591
    %593 = vadd.xlane.f32.xlu0 %v562
    %v594 = vpop.xlane.xlu0 %593
    %v595 = vadd.f32 %v484, %v564
    %v596 = vadd.f32 %v486, %v566
    %v597 = vadd.f32 %v488, %v568
    %v598 = vadd.f32 %v490, %v570
    %v599 = vadd.f32 %v492, %v572
    %v600 = vadd.f32 %v494, %v574
    %v601 = vadd.f32 %v496, %v576
    %v602 = vadd.f32 %v498, %v578
    %v603 = vadd.f32 %v500, %v580
    %v604 = vadd.f32 %v502, %v582
    %v605 = vadd.f32 %v504, %v584
    %v606 = vadd.f32 %v506, %v586
    %v607 = vadd.f32 %v508, %v588
    %v608 = vadd.f32 %v510, %v590
    %v609 = vadd.f32 %v512, %v592
    %v610 = vadd.f32 %v514, %v594
    %v611 = vlog2.pop %v595
    %v612 = vmul.f32 %v611, 0.6931472
    %v613 = vlog2.pop %v596
    %v614 = vmul.f32 %v613, 0.6931472
    %v615 = vlog2.pop %v597
    %v616 = vmul.f32 %v615, 0.6931472
    %v617 = vlog2.pop %v598
    %v618 = vmul.f32 %v617, 0.6931472
    %v619 = vlog2.pop %v599
    %v620 = vmul.f32 %v619, 0.6931472
    %v621 = vlog2.pop %v600
    %v622 = vmul.f32 %v621, 0.6931472
    %v623 = vlog2.pop %v601
    %v624 = vmul.f32 %v623, 0.6931472
    %v625 = vlog2.pop %v602
    %v626 = vmul.f32 %v625, 0.6931472
    %v627 = vlog2.pop %v603
    %v628 = vmul.f32 %v627, 0.6931472
    %v629 = vlog2.pop %v604
    %v630 = vmul.f32 %v629, 0.6931472
    %v631 = vlog2.pop %v605
    %v632 = vmul.f32 %v631, 0.6931472
    %v633 = vlog2.pop %v606
    %v634 = vmul.f32 %v633, 0.6931472
    %v635 = vlog2.pop %v607
    %v636 = vmul.f32 %v635, 0.6931472
    %v637 = vlog2.pop %v608
    %v638 = vmul.f32 %v637, 0.6931472
    %v639 = vlog2.pop %v609
    %v640 = vmul.f32 %v639, 0.6931472
    %v641 = vlog2.pop %v610
    %v642 = vmul.f32 %v641, 0.6931472
    %v643 = vsub.f32 %v467, %v612
    %v644 = vsub.f32 %v468, %v614
    %v645 = vsub.f32 %v469, %v616
    %v646 = vsub.f32 %v470, %v618
    %v647 = vsub.f32 %v471, %v620
    %v648 = vsub.f32 %v472, %v622
    %v649 = vsub.f32 %v473, %v624
    %v650 = vsub.f32 %v474, %v626
    %v651 = vsub.f32 %v475, %v628
    %v652 = vsub.f32 %v476, %v630
    %v653 = vsub.f32 %v477, %v632
    %v654 = vsub.f32 %v478, %v634
    %v655 = vsub.f32 %v479, %v636
    %v656 = vsub.f32 %v480, %v638
    %v657 = vsub.f32 %v481, %v640
    %v658 = vsub.f32 %v482, %v642
    %vm659 = vcmp.ne.s32.totalorder %v22, %v39
    %vm660 = vcmp.ne.s32.totalorder %v23, %v39
    %vm661 = vcmp.ne.s32.totalorder %v24, %v39
    %vm662 = vcmp.ne.s32.totalorder %v25, %v39
    %vm663 = vcmp.ne.s32.totalorder %v26, %v39
    %vm664 = vcmp.ne.s32.totalorder %v27, %v39
    %vm665 = vcmp.ne.s32.totalorder %v28, %v39
    %vm666 = vcmp.ne.s32.totalorder %v29, %v39
    %vm667 = vcmp.ne.s32.totalorder %v30, %v39
    %vm668 = vcmp.ne.s32.totalorder %v31, %v39
    %vm669 = vcmp.ne.s32.totalorder %v32, %v39
    %vm670 = vcmp.ne.s32.totalorder %v33, %v39
    %vm671 = vcmp.ne.s32.totalorder %v34, %v39
    %vm672 = vcmp.ne.s32.totalorder %v35, %v39
    %vm673 = vcmp.ne.s32.totalorder %v36, %v39
    %vm674 = vcmp.ne.s32.totalorder %v37, %v39
    %vm675 = vmand %vm401, %vm659
    %vm676 = vmand %vm402, %vm660
    %vm677 = vmand %vm403, %vm661
    %vm678 = vmand %vm404, %vm662
    %vm679 = vmand %vm405, %vm663
    %vm680 = vmand %vm406, %vm664
    %vm681 = vmand %vm407, %vm665
    %vm682 = vmand %vm408, %vm666
    %vm683 = vmand %vm409, %vm667
    %vm684 = vmand %vm410, %vm668
    %vm685 = vmand %vm411, %vm669
    %vm686 = vmand %vm412, %vm670
    %vm687 = vmand %vm413, %vm671
    %vm688 = vmand %vm414, %vm672
    %vm689 = vmand %vm415, %vm673
    %vm690 = vmand %vm416, %vm674
    %v691 = vsel %vm675, %v643, 0.0
    %v692 = vsel %vm676, %v644, 0.0
    %v693 = vsel %vm677, %v645, 0.0
    %v694 = vsel %vm678, %v646, 0.0
    %v695 = vsel %vm679, %v647, 0.0
    %v696 = vsel %vm680, %v648, 0.0
    %v697 = vsel %vm681, %v649, 0.0
    %v698 = vsel %vm682, %v650, 0.0
    %v699 = vsel %vm683, %v651, 0.0
    %v700 = vsel %vm684, %v652, 0.0
    %v701 = vsel %vm685, %v653, 0.0
    %v702 = vsel %vm686, %v654, 0.0
    %v703 = vsel %vm687, %v655, 0.0
    %v704 = vsel %vm688, %v656, 0.0
    %v705 = vsel %vm689, %v657, 0.0
    %v706 = vsel %vm690, %v658, 0.0
    %707 = vadd.xlane.f32.xlu0 %v691
    %v708 = vpop.xlane.xlu0 %707
    %709 = vadd.xlane.f32.xlu0 %v692
    %v710 = vpop.xlane.xlu0 %709
    %711 = vadd.xlane.f32.xlu0 %v693
    %v712 = vpop.xlane.xlu0 %711
    %713 = vadd.xlane.f32.xlu0 %v694
    %v714 = vpop.xlane.xlu0 %713
    %715 = vadd.xlane.f32.xlu0 %v695
    %v716 = vpop.xlane.xlu0 %715
    %717 = vadd.xlane.f32.xlu0 %v696
    %v718 = vpop.xlane.xlu0 %717
    %719 = vadd.xlane.f32.xlu0 %v697
    %v720 = vpop.xlane.xlu0 %719
    %721 = vadd.xlane.f32.xlu0 %v698
    %v722 = vpop.xlane.xlu0 %721
    %723 = vadd.xlane.f32.xlu0 %v699
    %v724 = vpop.xlane.xlu0 %723
    %725 = vadd.xlane.f32.xlu0 %v700
    %v726 = vpop.xlane.xlu0 %725
    %727 = vadd.xlane.f32.xlu0 %v701
    %v728 = vpop.xlane.xlu0 %727
    %729 = vadd.xlane.f32.xlu0 %v702
    %v730 = vpop.xlane.xlu0 %729
    %731 = vadd.xlane.f32.xlu0 %v703
    %v732 = vpop.xlane.xlu0 %731
    %733 = vadd.xlane.f32.xlu0 %v704
    %v734 = vpop.xlane.xlu0 %733
    %735 = vadd.xlane.f32.xlu0 %v705
    %v736 = vpop.xlane.xlu0 %735
    %737 = vadd.xlane.f32.xlu0 %v706
    %v738 = vpop.xlane.xlu0 %737
    %v739 = vld [vmem:[%s4] sm:$0xff]
    %v740 = vld [vmem:[%s4 + $0x8] sm:$0xff]
    %v741 = vld [vmem:[%s4 + $0x10] sm:$0xff]
    %v742 = vld [vmem:[%s4 + $0x18] sm:$0xff]
    %v743 = vld [vmem:[%s4 + $0x20] sm:$0xff]
    %v744 = vld [vmem:[%s4 + $0x28] sm:$0xff]
    %v745 = vld [vmem:[%s4 + $0x30] sm:$0xff]
    %v746 = vld [vmem:[%s4 + $0x38] sm:$0xff]
    %v747 = vld [vmem:[%s4 + $0x40] sm:$0xff]
    %v748 = vld [vmem:[%s4 + $0x48] sm:$0xff]
    %v749 = vld [vmem:[%s4 + $0x50] sm:$0xff]
    %v750 = vld [vmem:[%s4 + $0x58] sm:$0xff]
    %v751 = vld [vmem:[%s4 + $0x60] sm:$0xff]
    %v752 = vld [vmem:[%s4 + $0x68] sm:$0xff]
    %v753 = vld [vmem:[%s4 + $0x70] sm:$0xff]
    %v754 = vld [vmem:[%s4 + $0x78] sm:$0xff]
    %v755 = vmul.f32 %v708, %v739
    %v756 = vmul.f32 %v710, %v740
    %v757 = vmul.f32 %v712, %v741
    %v758 = vmul.f32 %v714, %v742
    %v759 = vmul.f32 %v716, %v743
    %v760 = vmul.f32 %v718, %v744
    %v761 = vmul.f32 %v720, %v745
    %v762 = vmul.f32 %v722, %v746
    %v763 = vmul.f32 %v724, %v747
    %v764 = vmul.f32 %v726, %v748
    %v765 = vmul.f32 %v728, %v749
    %v766 = vmul.f32 %v730, %v750
    %v767 = vmul.f32 %v732, %v751
    %v768 = vmul.f32 %v734, %v752
    %v769 = vmul.f32 %v736, %v753
    %v770 = vmul.f32 %v738, %v754
    %v771 = vsel %vm41, %v755, 0.0
    %v772 = vsel %vm42, %v756, 0.0
    %v773 = vsel %vm43, %v757, 0.0
    %v774 = vsel %vm44, %v758, 0.0
    %v775 = vsel %vm45, %v759, 0.0
    %v776 = vsel %vm46, %v760, 0.0
    %v777 = vsel %vm47, %v761, 0.0
    %v778 = vsel %vm48, %v762, 0.0
    %v779 = vsel %vm49, %v763, 0.0
    %v780 = vsel %vm50, %v764, 0.0
    %v781 = vsel %vm51, %v765, 0.0
    %v782 = vsel %vm52, %v766, 0.0
    %v783 = vsel %vm53, %v767, 0.0
    %v784 = vsel %vm54, %v768, 0.0
    %v785 = vsel %vm55, %v769, 0.0
    %v786 = vsel %vm56, %v770, 0.0
    %vm787 = vcmask 7168
    %v788 = vsel %vm787, %v771, 0.0
    %v789 = vsel %vm787, %v772, 0.0
    %v790 = vadd.f32 %v788, %v789
    %v791 = vsel %vm787, %v773, 0.0
    %v792 = vadd.f32 %v790, %v791
    %v793 = vsel %vm787, %v774, 0.0
    %v794 = vadd.f32 %v792, %v793
    %v795 = vsel %vm787, %v775, 0.0
    %v796 = vadd.f32 %v794, %v795
    %v797 = vsel %vm787, %v776, 0.0
    %v798 = vadd.f32 %v796, %v797
    %v799 = vsel %vm787, %v777, 0.0
    %v800 = vadd.f32 %v798, %v799
    %v801 = vsel %vm787, %v778, 0.0
    %v802 = vadd.f32 %v800, %v801
    %v803 = vsel %vm787, %v779, 0.0
    %v804 = vadd.f32 %v802, %v803
    %v805 = vsel %vm787, %v780, 0.0
    %v806 = vadd.f32 %v804, %v805
    %v807 = vsel %vm787, %v781, 0.0
    %v808 = vadd.f32 %v806, %v807
    %v809 = vsel %vm787, %v782, 0.0
    %v810 = vadd.f32 %v808, %v809
    %v811 = vsel %vm787, %v783, 0.0
    %v812 = vadd.f32 %v810, %v811
    %v813 = vsel %vm787, %v784, 0.0
    %v814 = vadd.f32 %v812, %v813
    %v815 = vsel %vm787, %v785, 0.0
    %v816 = vadd.f32 %v814, %v815
    %v817 = vsel %vm787, %v786, 0.0
    %v818 = vadd.f32 %v816, %v817
    %819 = vadd.xlane.f32.xlu0 %v818
    %v820 = vpop.xlane.xlu0 %819
    %v821 = vrot.slane %v820, 4
    %v822 = vadd.f32 %v820, %v821
    %v823 = vrot.slane %v822, 2
    %v824 = vadd.f32 %v822, %v823
    %v825 = vrot.slane %v824, 1
    %v826 = vadd.f32 %v824, %v825
    %s827 = vtos %v826
    %s828 = smul.f32 %s827, -1.4285715
    %s829 = scvt.s32.f32 %s20
    %v830 = vstv %s829
    %v831 = vrcp.pop %v830
    %s832 = vtos %v831
    %s833 = smul.f32 %s828, %s832
    %v834 = vstv %s833
    %vm835 = vcmask 0
    %836 = vst.msk [vmem:[#allocation4] sm:$0x1] %vm835, %v834
    // Predicated region
    $region18: #{_contrast_loss_device.1} parent=1 // pred_check
      _
    $region19: #{_contrast_loss_device.1} parent=1 // pred_check_branch
      %838 = sbr.rel (0) target = $region21
    $region20: #{_contrast_loss_device.1} parent=1 // pred_region
      %s840 = ssub.s32 16, 16
      %841 = vsyncadd [#allocation5], %s840
      %s843 = sshll.u32 [#allocation4], 4
      %s844 = int_to_ptr.vmem [resolvable:$true] %s843
      %846 = dma.vmem_to_hbm [thread:$0]  %s844, 16, %s5, [#allocation5]
    $region21: #{_contrast_loss_device.1} parent=1 // pred_fallthru
      _
    // Predicated region
    $region22: #{_contrast_loss_device.1} parent=1 // pred_check
      _
    $region23: #{_contrast_loss_device.1} parent=1 // pred_check_branch
      %848 = sbr.rel (0) target = $region25
    $region24: #{_contrast_loss_device.1} parent=1 // pred_region
      %849 = dma.done [#allocation5], 16
    $region25: #{_contrast_loss_device.1} parent=1 // pred_fallthru
      _
    %850 = vsyncpa [#allocation5], 1

</llo_original>
